<compile_context>
chip_gen: v7x
topology: tpu7x:2x2x1
jax: 0.10.0
libtpu: 0.0.40
codegen_flags: <defaults>
</compile_context>

<pallas_src>
import functools
import math

import jax
import jax.numpy as jnp
from jax.experimental import pallas as pl
from jax.experimental.pallas import tpu as pltpu


# ---------------------------------------------------------------------------
# Pallas kernels
# ---------------------------------------------------------------------------

def _grouped_conv3x3_kernel(t_ref, w_ref, b_ref, o_ref):
    """Grouped 3x3 conv as ONE block-diagonal MXU dot.

    t_ref: (G*9*Cin, M)       bf16 im2col taps, M = N*Hs*Ws
    w_ref: (G*Cout, G*9*Cin)  bf16 block-diagonal weight
    b_ref: (G*Cout, 1)        f32 bias
    o_ref: (G*Cout, M)        bf16
    """
    acc = jnp.dot(w_ref[...], t_ref[...], preferred_element_type=jnp.float32)
    o_ref[...] = (acc + b_ref[...]).astype(o_ref.dtype)


def _fuse_h_kernel(xh_ref, x_ref, w1_ref, w2_ref, gamma_ref, beta_ref,
                   pos_ref, o_ref):
    """fuse_h 1x1 conv + BatchNorm2d (batch stats) + exact GELU + pos_w add.

    Channel-major layout: activations are (C, M) with M = N*H*W on the lane
    axis, so both MXU dots and the single output store are lane-dense.

    xh_ref, x_ref : (C, M)  bf16  the two halves of torch.cat([x_h, x], dim=1)
    w1_ref, w2_ref: (C, C)  bf16  fuse_h weight split along input channels
    gamma_ref, beta_ref: (C, 1) f32
    pos_ref: (C, H*W) f32   pos_w, tiled across the batch in-kernel
    o_ref:   (C, M)   bf16
    """
    y = jnp.dot(w1_ref[...], xh_ref[...], preferred_element_type=jnp.float32)
    y = y + jnp.dot(w2_ref[...], x_ref[...], preferred_element_type=jnp.float32)
    # BatchNorm2d in its default (training) mode: per-channel batch stats over
    # (N, H, W) == the full lane axis of this layout, biased variance.  The
    # whole N*H*W extent is one block, so the statistics stay global/exact.
    mean = jnp.mean(y, axis=1, keepdims=True)
    var = jnp.mean(jnp.square(y - mean), axis=1, keepdims=True)
    y = (y - mean) * jax.lax.rsqrt(var + 1e-5)
    y = y * gamma_ref[...] + beta_ref[...]
    # exact (erf-based) GELU, matching nn.GELU() default (f32 math)
    y = 0.5 * y * (1.0 + jax.lax.erf(y * 0.7071067811865476))
    # + pos_w: tile to the full M width in-register (lane-dim concatenate of a
    # value, no HBM replication) so the store below is one lane-dense vst.
    hw = pos_ref.shape[1]
    n_rep = o_ref.shape[1] // hw
    pos = pos_ref[...]
    if n_rep > 1:
        pos = jnp.concatenate([pos] * n_rep, axis=1)
    o_ref[...] = (y + pos).astype(o_ref.dtype)


def _fuse_w_kernel(x_ref, xw_ref, w1_ref, w2_ref, o_ref):
    """fuse_w 1x1 conv (no bias): out = W1 @ x + W2 @ x_w, all (C, M)."""
    y = jnp.dot(w1_ref[...], x_ref[...], preferred_element_type=jnp.float32)
    y = y + jnp.dot(w2_ref[...], xw_ref[...], preferred_element_type=jnp.float32)
    o_ref[...] = y.astype(o_ref.dtype)


# ---------------------------------------------------------------------------
# Wrappers around pallas_call (single invocation, whole-array VMEM blocks)
# ---------------------------------------------------------------------------

def _vmem_specs(n):
    return [pl.BlockSpec(memory_space=pltpu.MemorySpace.VMEM) for _ in range(n)]


def _nbytes(*objs):
    return int(sum(math.prod(o.shape) * o.dtype.itemsize for o in objs))


def grouped_conv3x3(x, w, b):
    """Grouped 3x3 conv (stride 1, padding 1), like nn.Conv2d(..., groups=G).

    x: (N, G, Cin, Hs, Ws); w: (G, Cout, Cin, 3, 3); b: (G, Cout)
    returns: (G*Cout, N*Hs*Ws) bf16, with M index = n*Hs*Ws + hs*Ws + ws
    """
    N, G, Cin, Hs, Ws = x.shape
    Cout = w.shape[1]
    M = N * Hs * Ws
    K = 9 * Cin

    xb = x.astype(jnp.bfloat16)
    # im2col glue (plain JAX, bf16): tap index = kh*3 + kw; per-group K
    # ordering (cin, kh, kw) matches w.reshape(G, Cout, Cin*9).
    # TODO(synk): at production sizes form the 9 windows in-kernel from one
    # padded VMEM block (needs a sublane->lane relayout of the sliced window,
    # left to XLA here for lowering robustness).
    xp = jnp.pad(xb, ((0, 0), (0, 0), (0, 0), (1, 1), (1, 1)))
    windows = jnp.stack([xp[:, :, :, kh:kh + Hs, kw:kw + Ws]
                         for kh in range(3) for kw in range(3)], axis=3)
    taps = jnp.transpose(windows, (1, 2, 3, 0, 4, 5)).reshape(G * K, M)

    # Block-diagonal weight: one (G*Cout, G*K) dot instead of G tiny dots.
    w_flat = w.astype(jnp.bfloat16).reshape(G, Cout, K)
    eye = jnp.eye(G, dtype=w_flat.dtype)
    w_bd = (w_flat[:, :, None, :] * eye[:, None, :, None]).reshape(G * Cout, G * K)
    b_col = b.astype(jnp.float32).reshape(G * Cout, 1)

    cost = pl.CostEstimate(
        flops=int(2 * (G * Cout) * (G * K) * M),
        transcendentals=0,
        bytes_accessed=_nbytes(taps, w_bd, b_col) + G * Cout * M * 2)
    return pl.pallas_call(
        _grouped_conv3x3_kernel,
        out_shape=jax.ShapeDtypeStruct((G * Cout, M), jnp.bfloat16),
        in_specs=_vmem_specs(3),
        out_specs=pl.BlockSpec(memory_space=pltpu.MemorySpace.VMEM),
        cost_estimate=cost,
    )(taps, w_bd, b_col)


def fused_fuse_h(xh_cm, x_cm, w1, w2, gamma, beta, pos_cm):
    C, M = x_cm.shape
    cost = pl.CostEstimate(
        flops=int(4 * C * C * M + 12 * C * M),
        transcendentals=int(C * M),
        bytes_accessed=_nbytes(xh_cm, x_cm, w1, w2, gamma, beta, pos_cm) + C * M * 2)
    return pl.pallas_call(
        _fuse_h_kernel,
        out_shape=jax.ShapeDtypeStruct((C, M), jnp.bfloat16),
        in_specs=_vmem_specs(7),
        out_specs=pl.BlockSpec(memory_space=pltpu.MemorySpace.VMEM),
        cost_estimate=cost,
    )(xh_cm, x_cm, w1, w2, gamma, beta, pos_cm)


def fused_fuse_w(x_cm, xw_cm, w1, w2):
    C, M = x_cm.shape
    cost = pl.CostEstimate(
        flops=int(4 * C * C * M),
        transcendentals=0,
        bytes_accessed=_nbytes(x_cm, xw_cm, w1, w2) + C * M * 4)
    return pl.pallas_call(
        _fuse_w_kernel,
        out_shape=jax.ShapeDtypeStruct((C, M), jnp.float32),
        in_specs=_vmem_specs(4),
        out_specs=pl.BlockSpec(memory_space=pltpu.MemorySpace.VMEM),
        cost_estimate=cost,
    )(x_cm, xw_cm, w1, w2)


# ---------------------------------------------------------------------------
# Model glue (pure JAX): RelativePosition gather + the view/permute chain
# ---------------------------------------------------------------------------

def relative_position(table, length_q, length_k, max_rel):
    rq = jnp.arange(length_q)
    rk = jnp.arange(length_k)
    dist = rk[None, :] - rq[:, None]
    idx = jnp.clip(dist, -max_rel, max_rel) + max_rel
    return table[idx]            # (length_q, length_k, num_units)


def gmm_forward(x, params):
    N, C, H, W = x.shape
    sC = C // 4                  # self.C in the PyTorch module
    C1 = C // sC                 # patch factor = 4
    assert H == W, "GMM's grouped-conv channel counts require H == W"
    HW = H * W
    M = N * HW

    pos_h = relative_position(params['table_h'], H, W, H)      # (H, W, C)
    pos_w = relative_position(params['table_w'], H, W, W)      # (H, W, C)
    pos_h_nchw = jnp.transpose(pos_h, (2, 0, 1))[None]          # (1, C, H, W)
    pos_w_cm = jnp.transpose(pos_w, (2, 0, 1)).reshape(C, HW)   # (C, H*W)

    # Channel-major (C, N*H*W) bf16 view of x, shared by both fuse kernels.
    x_cm = jnp.transpose(x, (1, 0, 2, 3)).reshape(C, M).astype(jnp.bfloat16)

    # ---- horizontal branch (proj_h) ---------------------------------------
    xh = (x + pos_h_nchw).astype(jnp.bfloat16)
    xh = xh.reshape(N, C1, sC, H, W)
    xh = jnp.transpose(xh, (0, 1, 3, 2, 4)).reshape(N, C1, H, sC * W)
    xh = jnp.transpose(xh, (0, 3, 1, 2))                        # (N, sC*W, C1, H)
    xh = xh.reshape(N, sC, W, C1, H)                            # (N, G, Cin=W, C1, H)
    conv_h = grouped_conv3x3(xh,
                             params['proj_h_w'].reshape(sC, H, H, 3, 3),
                             params['proj_h_b'].reshape(sC, H))
    # conv_h[g*H + w', n*C1*H + c1*H + h] -> channel-major x_h: (C=(c1,g), n, h, w')
    conv_h = conv_h.reshape(sC, H, N, C1, H)                    # (g, w', n, c1, h)
    xh_cm = jnp.transpose(conv_h, (3, 0, 2, 4, 1)).reshape(C, M)

    # fuse_h (1x1) + BN + GELU + pos_w, fused in one Pallas kernel (no concat:
    # torch.cat([x_h, x], dim=1) handled as two half-weight dots).
    fh = params['fuse_h_w'].astype(jnp.bfloat16)                # (C, 2C)
    xh_cm = fused_fuse_h(xh_cm, x_cm, fh[:, :C], fh[:, C:],
                         params['bn_gamma'].reshape(C, 1),
                         params['bn_beta'].reshape(C, 1),
                         pos_w_cm)

    # ---- vertical branch (proj_w) ------------------------------------------
    xw = xh_cm.reshape(C1, sC, N, H, W)                         # (c1, g, n, h, w)
    xw = jnp.transpose(xw, (2, 1, 3, 0, 4))                     # (N, G, Cin=H, C1, W)
    conv_w = grouped_conv3x3(xw,
                             params['proj_w_w'].reshape(sC, W, W, 3, 3),
                             params['proj_w_b'].reshape(sC, W))
    # conv_w[g*W + h', n*C1*W + c1*W + w] -> channel-major x_w: (C=(c1,g), n, h', w)
    conv_w = conv_w.reshape(sC, W, N, C1, W)                    # (g, h', n, c1, w)
    xw_cm = jnp.transpose(conv_w, (3, 0, 2, 1, 4)).reshape(C, M)

    # fuse_w (1x1 conv, no bias); cat([x, x_w]) handled as two half-weight dots
    fw = params['fuse_w_w'].astype(jnp.bfloat16)                # (C, 2C)
    out_cm = fused_fuse_w(x_cm, xw_cm, fw[:, :C], fw[:, C:])
    return jnp.transpose(out_cm.reshape(C, N, H, W), (1, 0, 2, 3))


# ---------------------------------------------------------------------------
# Main
# ---------------------------------------------------------------------------

if __name__ == "__main__":
    N, channels, H, W = 2, 16, 8, 8
    sC = channels // 4
    key = jax.random.PRNGKey(0)
    ks = jax.random.split(key, 11)
    # Deterministic synthetic parameters (shapes from GMM.__init__).
    # TODO(synk): trunc_normal_/xavier init and BatchNorm running-stat updates
    # are training-time details; parameters here are deterministic stand-ins.
    params = {
        'proj_h_w': 0.1 * jax.random.normal(ks[0], (sC * H, H, 3, 3), jnp.float32),
        'proj_h_b': 0.1 * jax.random.normal(ks[1], (sC * H,), jnp.float32),
        'proj_w_w': 0.1 * jax.random.normal(ks[2], (sC * W, W, 3, 3), jnp.float32),
        'proj_w_b': 0.1 * jax.random.normal(ks[3], (sC * W,), jnp.float32),
        'fuse_h_w': 0.1 * jax.random.normal(ks[4], (channels, 2 * channels), jnp.float32),
        'fuse_w_w': 0.1 * jax.random.normal(ks[5], (channels, 2 * channels), jnp.float32),
        'table_h': 0.02 * jax.random.normal(ks[6], (2 * H + 1, channels), jnp.float32),
        'table_w': 0.02 * jax.random.normal(ks[7], (2 * W + 1, channels), jnp.float32),
        'bn_gamma': 1.0 + 0.1 * jax.random.normal(ks[8], (channels,), jnp.float32),
        'bn_beta': 0.1 * jax.random.normal(ks[9], (channels,), jnp.float32),
    }
    x = jax.random.normal(ks[10], (N, channels, H, W), jnp.float32)

    out = jax.jit(functools.partial(gmm_forward, params=params))(x)
    out = jax.block_until_ready(out)
    assert out.shape == (N, channels, H, W) and out.dtype == jnp.float32
    print("KERNEL_OK")
</pallas_src>

<mosaic_0001>
module attributes {stable_mosaic.version = 11 : i64} {
  func.func @_grouped_conv3x3_kernel(%arg0: memref<288x64xbf16, #tpu.memory_space<vmem>>, %arg1: memref<32x288xbf16, #tpu.memory_space<vmem>>, %arg2: memref<32x1xf32, #tpu.memory_space<vmem>>, %arg3: memref<32x64xbf16, #tpu.memory_space<vmem>>) attributes {dimension_semantics = [], scalar_prefetch = 0 : i64, scratch_operands = 0 : i64, tpu.core_type = #tpu.core_type<tc>} {
    %c0 = arith.constant 0 : index
    %c0_0 = arith.constant 0 : index
    %0 = vector.load %arg1[%c0, %c0_0] : memref<32x288xbf16, #tpu.memory_space<vmem>>, vector<32x288xbf16>
    %c0_1 = arith.constant 0 : index
    %c0_2 = arith.constant 0 : index
    %1 = vector.load %arg0[%c0_1, %c0_2] : memref<288x64xbf16, #tpu.memory_space<vmem>>, vector<288x64xbf16>
    %cst = arith.constant dense<0.000000e+00> : vector<32x64xf32>
    %2 = tpu.matmul %0, %1, %cst {dimension_numbers = #tpu.dot_dimension_numbers<[1], [0], [0], [1], [0, 0, 1, 1], [], []>} : vector<32x288xbf16>, vector<288x64xbf16>, vector<32x64xf32> -> vector<32x64xf32>
    %c0_3 = arith.constant 0 : index
    %c0_4 = arith.constant 0 : index
    %3 = vector.load %arg2[%c0_3, %c0_4] : memref<32x1xf32, #tpu.memory_space<vmem>>, vector<32x1xf32>
    %4 = vector.broadcast %3 : vector<32x1xf32> to vector<32x64xf32>
    %5 = arith.addf %2, %4 : vector<32x64xf32>
    %6 = arith.truncf %5 : vector<32x64xf32> to vector<32x64xbf16>
    %c0_5 = arith.constant 0 : index
    %c0_6 = arith.constant 0 : index
    %7 = vector.load %arg3[%c0_5, %c0_6] : memref<32x64xbf16, #tpu.memory_space<vmem>>, vector<32x64xbf16>
    tpu.vector_store %arg3[%c0_5, %c0_6], %6 {strides = array<i32>} : memref<32x64xbf16, #tpu.memory_space<vmem>>, vector<32x64xbf16>,
    return
  }
}

module attributes {stable_mosaic.version = 11 : i64} {
  func.func @_fuse_h_kernel(%arg0: memref<16x128xbf16, #tpu.memory_space<vmem>>, %arg1: memref<16x128xbf16, #tpu.memory_space<vmem>>, %arg2: memref<16x16xbf16, #tpu.memory_space<vmem>>, %arg3: memref<16x16xbf16, #tpu.memory_space<vmem>>, %arg4: memref<16x1xf32, #tpu.memory_space<vmem>>, %arg5: memref<16x1xf32, #tpu.memory_space<vmem>>, %arg6: memref<16x64xf32, #tpu.memory_space<vmem>>, %arg7: memref<16x128xbf16, #tpu.memory_space<vmem>>) attributes {dimension_semantics = [], scalar_prefetch = 0 : i64, scratch_operands = 0 : i64, tpu.core_type = #tpu.core_type<tc>} {
    %c0 = arith.constant 0 : index
    %c0_0 = arith.constant 0 : index
    %0 = vector.load %arg2[%c0, %c0_0] : memref<16x16xbf16, #tpu.memory_space<vmem>>, vector<16x16xbf16>
    %c0_1 = arith.constant 0 : index
    %c0_2 = arith.constant 0 : index
    %1 = vector.load %arg0[%c0_1, %c0_2] : memref<16x128xbf16, #tpu.memory_space<vmem>>, vector<16x128xbf16>
    %cst = arith.constant dense<0.000000e+00> : vector<16x128xf32>
    %2 = tpu.matmul %0, %1, %cst {dimension_numbers = #tpu.dot_dimension_numbers<[1], [0], [0], [1], [0, 0, 1, 1], [], []>} : vector<16x16xbf16>, vector<16x128xbf16>, vector<16x128xf32> -> vector<16x128xf32>
    %c0_3 = arith.constant 0 : index
    %c0_4 = arith.constant 0 : index
    %3 = vector.load %arg3[%c0_3, %c0_4] : memref<16x16xbf16, #tpu.memory_space<vmem>>, vector<16x16xbf16>
    %c0_5 = arith.constant 0 : index
    %c0_6 = arith.constant 0 : index
    %4 = vector.load %arg1[%c0_5, %c0_6] : memref<16x128xbf16, #tpu.memory_space<vmem>>, vector<16x128xbf16>
    %cst_7 = arith.constant dense<0.000000e+00> : vector<16x128xf32>
    %5 = tpu.matmul %3, %4, %cst_7 {dimension_numbers = #tpu.dot_dimension_numbers<[1], [0], [0], [1], [0, 0, 1, 1], [], []>} : vector<16x16xbf16>, vector<16x128xbf16>, vector<16x128xf32> -> vector<16x128xf32>
    %6 = arith.addf %2, %5 : vector<16x128xf32>
    %cst_8 = arith.constant dense<0.000000e+00> : vector<16xf32>
    %7 = vector.multi_reduction <add>, %6, %cst_8 [1] : vector<16x128xf32> to vector<16xf32>
    %8 = vector.shape_cast %7 : vector<16xf32> to vector<16x1xf32>
    %cst_9 = arith.constant 1.280000e+02 : f32
    %9 = vector.broadcast %cst_9 : f32 to vector<16x1xf32>
    %10 = arith.divf %8, %9 : vector<16x1xf32>
    %11 = vector.broadcast %10 : vector<16x1xf32> to vector<16x128xf32>
    %12 = arith.subf %6, %11 : vector<16x128xf32>
    %13 = arith.mulf %12, %12 : vector<16x128xf32>
    %cst_10 = arith.constant dense<0.000000e+00> : vector<16xf32>
    %14 = vector.multi_reduction <add>, %13, %cst_10 [1] : vector<16x128xf32> to vector<16xf32>
    %15 = vector.shape_cast %14 : vector<16xf32> to vector<16x1xf32>
    %cst_11 = arith.constant 1.280000e+02 : f32
    %16 = vector.broadcast %cst_11 : f32 to vector<16x1xf32>
    %17 = arith.divf %15, %16 : vector<16x1xf32>
    %18 = vector.broadcast %10 : vector<16x1xf32> to vector<16x128xf32>
    %19 = arith.subf %6, %18 : vector<16x128xf32>
    %cst_12 = arith.constant 9.99999974E-6 : f32
    %20 = vector.broadcast %cst_12 : f32 to vector<16x1xf32>
    %21 = arith.addf %17, %20 : vector<16x1xf32>
    %22 = math.rsqrt %21 : vector<16x1xf32>
    %23 = vector.broadcast %22 : vector<16x1xf32> to vector<16x128xf32>
    %24 = arith.mulf %19, %23 : vector<16x128xf32>
    %c0_13 = arith.constant 0 : index
    %c0_14 = arith.constant 0 : index
    %25 = vector.load %arg4[%c0_13, %c0_14] : memref<16x1xf32, #tpu.memory_space<vmem>>, vector<16x1xf32>
    %26 = vector.broadcast %25 : vector<16x1xf32> to vector<16x128xf32>
    %27 = arith.mulf %24, %26 : vector<16x128xf32>
    %c0_15 = arith.constant 0 : index
    %c0_16 = arith.constant 0 : index
    %28 = vector.load %arg5[%c0_15, %c0_16] : memref<16x1xf32, #tpu.memory_space<vmem>>, vector<16x1xf32>
    %29 = vector.broadcast %28 : vector<16x1xf32> to vector<16x128xf32>
    %30 = arith.addf %27, %29 : vector<16x128xf32>
    %cst_17 = arith.constant 5.000000e-01 : f32
    %31 = vector.broadcast %cst_17 : f32 to vector<16x128xf32>
    %32 = arith.mulf %31, %30 : vector<16x128xf32>
    %cst_18 = arith.constant 0.707106769 : f32
    %33 = vector.broadcast %cst_18 : f32 to vector<16x128xf32>
    %34 = arith.mulf %30, %33 : vector<16x128xf32>
    %35 = math.erf %34 : vector<16x128xf32>
    %cst_19 = arith.constant 1.000000e+00 : f32
    %36 = vector.broadcast %cst_19 : f32 to vector<16x128xf32>
    %37 = arith.addf %36, %35 : vector<16x128xf32>
    %38 = arith.mulf %32, %37 : vector<16x128xf32>
    %c0_20 = arith.constant 0 : index
    %c0_21 = arith.constant 0 : index
    %39 = vector.load %arg6[%c0_20, %c0_21] : memref<16x64xf32, #tpu.memory_space<vmem>>, vector<16x64xf32>
    %40 = tpu.concatenate %39, %39 in 1 : vector<16x64xf32>, vector<16x64xf32> -> vector<16x128xf32>
    %41 = arith.addf %38, %40 : vector<16x128xf32>
    %42 = arith.truncf %41 : vector<16x128xf32> to vector<16x128xbf16>
    %c0_22 = arith.constant 0 : index
    %c0_23 = arith.constant 0 : index
    %43 = vector.load %arg7[%c0_22, %c0_23] : memref<16x128xbf16, #tpu.memory_space<vmem>>, vector<16x128xbf16>
    tpu.vector_store %arg7[%c0_22, %c0_23], %42 {strides = array<i32>} : memref<16x128xbf16, #tpu.memory_space<vmem>>, vector<16x128xbf16>,
    return
  }
}

module attributes {stable_mosaic.version = 11 : i64} {
  func.func @_fuse_w_kernel(%arg0: memref<16x128xbf16, #tpu.memory_space<vmem>>, %arg1: memref<16x128xbf16, #tpu.memory_space<vmem>>, %arg2: memref<16x16xbf16, #tpu.memory_space<vmem>>, %arg3: memref<16x16xbf16, #tpu.memory_space<vmem>>, %arg4: memref<16x128xf32, #tpu.memory_space<vmem>>) attributes {dimension_semantics = [], scalar_prefetch = 0 : i64, scratch_operands = 0 : i64, tpu.core_type = #tpu.core_type<tc>} {
    %c0 = arith.constant 0 : index
    %c0_0 = arith.constant 0 : index
    %0 = vector.load %arg2[%c0, %c0_0] : memref<16x16xbf16, #tpu.memory_space<vmem>>, vector<16x16xbf16>
    %c0_1 = arith.constant 0 : index
    %c0_2 = arith.constant 0 : index
    %1 = vector.load %arg0[%c0_1, %c0_2] : memref<16x128xbf16, #tpu.memory_space<vmem>>, vector<16x128xbf16>
    %cst = arith.constant dense<0.000000e+00> : vector<16x128xf32>
    %2 = tpu.matmul %0, %1, %cst {dimension_numbers = #tpu.dot_dimension_numbers<[1], [0], [0], [1], [0, 0, 1, 1], [], []>} : vector<16x16xbf16>, vector<16x128xbf16>, vector<16x128xf32> -> vector<16x128xf32>
    %c0_3 = arith.constant 0 : index
    %c0_4 = arith.constant 0 : index
    %3 = vector.load %arg3[%c0_3, %c0_4] : memref<16x16xbf16, #tpu.memory_space<vmem>>, vector<16x16xbf16>
    %c0_5 = arith.constant 0 : index
    %c0_6 = arith.constant 0 : index
    %4 = vector.load %arg1[%c0_5, %c0_6] : memref<16x128xbf16, #tpu.memory_space<vmem>>, vector<16x128xbf16>
    %cst_7 = arith.constant dense<0.000000e+00> : vector<16x128xf32>
    %5 = tpu.matmul %3, %4, %cst_7 {dimension_numbers = #tpu.dot_dimension_numbers<[1], [0], [0], [1], [0, 0, 1, 1], [], []>} : vector<16x16xbf16>, vector<16x128xbf16>, vector<16x128xf32> -> vector<16x128xf32>
    %6 = arith.addf %2, %5 : vector<16x128xf32>
    %c0_8 = arith.constant 0 : index
    %c0_9 = arith.constant 0 : index
    %7 = vector.load %arg4[%c0_8, %c0_9] : memref<16x128xf32, #tpu.memory_space<vmem>>, vector<16x128xf32>
    tpu.vector_store %arg4[%c0_8, %c0_9], %6 {strides = array<i32>} : memref<16x128xf32, #tpu.memory_space<vmem>>, vector<16x128xf32>,
    return
  }
}

</mosaic_0001>

<llo_original>
// kernel: gmm_forward.4
$region0: #{gmm_forward.4}
  #allocation0 [shape = 'u32[]', space=smem, size = 0x4, offset = 0x4, fixed_abs, tag = 'smem constant byte address 0x4 - core index']
  #allocation1 [shape = 'u32[144,128]{1,0:T(1,128)}', space=vmem, size = 0x12000, scoped, tag = 'internal scratch']
  %s0 = inlined_call_operand.vmem [shape: bf16[288,64], index: 0, kind: input, shape index: {}]
  %s1 = inlined_call_operand.vmem [shape: bf16[32,288], index: 1, kind: input, shape index: {}]
  %s2 = inlined_call_operand.vmem [shape: f32[32,1], index: 2, kind: input, shape index: {}]
  %s3 = inlined_call_operand.vmem [shape: bf16[32,64], index: 3, kind: output, shape index: {}]
  %s4 = sld [smem:[#allocation0]]
  $region22: #{gmm_forward.4} parent=0
    _
  %s6 = ssub.s32 1, %s4
  %s7 = scalar_select 0, %s6, %s4
  // Predicated region
  $region2: #{gmm_forward.4} parent=0 // pred_check
    _
  $region3: #{gmm_forward.4} parent=0 // pred_check_branch
    %9 = sbr.rel (0) target = $region5
  $region4: #{gmm_forward.4} parent=0 // pred_region
    _
  $region5: #{gmm_forward.4} parent=0 // pred_fallthru
    _
  // Predicated region
  $region6: #{gmm_forward.4} parent=0 // pred_check
    _
  $region7: #{gmm_forward.4} parent=0 // pred_check_branch
    %11 = sbr.rel (0) target = $region9
  $region8: #{gmm_forward.4} parent=0 // pred_region
    _
  $region9: #{gmm_forward.4} parent=0 // pred_fallthru
    _
  // Predicated region
  $region10: #{gmm_forward.4} parent=0 // pred_check
    _
  $region11: #{gmm_forward.4} parent=0 // pred_check_branch
    %13 = sbr.rel (0) target = $region13
  $region12: #{gmm_forward.4} parent=0 // pred_region
    _
  $region13: #{gmm_forward.4} parent=0 // pred_fallthru
    _
  %v15 = vld [vmem:[%s1] sm:$0xff]
  %v16 = vld [vmem:[%s1 + $0x8] sm:$0xf]
  %v17 = vld [vmem:[%s1 + $0xc] sm:$0xff]
  %v18 = vld [vmem:[%s1 + $0x14] sm:$0xf]
  %v19 = vld [vmem:[%s1 + $0x18] sm:$0xff]
  %v20 = vld [vmem:[%s1 + $0x20] sm:$0xf]
  %v21 = vld [vmem:[%s1 + $0x24] sm:$0xff]
  %v22 = vld [vmem:[%s1 + $0x2c] sm:$0xf]
  %v23 = vld [vmem:[%s0] sm:$0xf]
  %v24 = vld [vmem:[%s0 + $0x4] sm:$0xf]
  %v25 = vld [vmem:[%s0 + $0x8] sm:$0xf]
  %v26 = vld [vmem:[%s0 + $0xc] sm:$0xf]
  %v27 = vld [vmem:[%s0 + $0x10] sm:$0xf]
  %v28 = vld [vmem:[%s0 + $0x14] sm:$0xf]
  %v29 = vld [vmem:[%s0 + $0x18] sm:$0xf]
  %v30 = vld [vmem:[%s0 + $0x1c] sm:$0xf]
  %v31 = vld [vmem:[%s0 + $0x20] sm:$0xf]
  %v32 = vld [vmem:[%s0 + $0x24] sm:$0xf]
  %v33 = vld [vmem:[%s0 + $0x28] sm:$0xf]
  %v34 = vld [vmem:[%s0 + $0x2c] sm:$0xf]
  %v35 = vld [vmem:[%s0 + $0x30] sm:$0xf]
  %v36 = vld [vmem:[%s0 + $0x34] sm:$0xf]
  %v37 = vld [vmem:[%s0 + $0x38] sm:$0xf]
  %v38 = vld [vmem:[%s0 + $0x3c] sm:$0xf]
  %v39 = vld [vmem:[%s0 + $0x40] sm:$0xf]
  %v40 = vld [vmem:[%s0 + $0x44] sm:$0xf]
  %v41 = vld [vmem:[%s0 + $0x48] sm:$0xf]
  %v42 = vld [vmem:[%s0 + $0x4c] sm:$0xf]
  %v43 = vld [vmem:[%s0 + $0x50] sm:$0xf]
  %v44 = vld [vmem:[%s0 + $0x54] sm:$0xf]
  %v45 = vld [vmem:[%s0 + $0x58] sm:$0xf]
  %v46 = vld [vmem:[%s0 + $0x5c] sm:$0xf]
  %v47 = vld [vmem:[%s0 + $0x60] sm:$0xf]
  %v48 = vld [vmem:[%s0 + $0x64] sm:$0xf]
  %v49 = vld [vmem:[%s0 + $0x68] sm:$0xf]
  %v50 = vld [vmem:[%s0 + $0x6c] sm:$0xf]
  %v51 = vld [vmem:[%s0 + $0x70] sm:$0xf]
  %v52 = vld [vmem:[%s0 + $0x74] sm:$0xf]
  %v53 = vld [vmem:[%s0 + $0x78] sm:$0xf]
  %v54 = vld [vmem:[%s0 + $0x7c] sm:$0xf]
  %v55 = vld [vmem:[%s0 + $0x80] sm:$0xf]
  %v56 = vld [vmem:[%s0 + $0x84] sm:$0xf]
  %v57 = vld [vmem:[%s0 + $0x88] sm:$0xf]
  %v58 = vld [vmem:[%s0 + $0x8c] sm:$0xf]
  %v59 = vld [vmem:[%s2] sm:$0xff]
  %v60 = vld [vmem:[%s2 + $0x8] sm:$0xff]
  %v61 = vld [vmem:[%s2 + $0x10] sm:$0xff]
  %v62 = vld [vmem:[%s2 + $0x18] sm:$0xff]
  %64 = vset.pattern.permute.xlu0 0
  %65 = vperm.xlu0 %64, %v59
  %v66 = vpop.permute.xlu0 %65
  %69 = vset.pattern.permute.xlu0 0
  %70 = vperm.xlu0 %69, %v60
  %v71 = vpop.permute.xlu0 %70
  %74 = vset.pattern.permute.xlu0 0
  %75 = vperm.xlu0 %74, %v61
  %v76 = vpop.permute.xlu0 %75
  %79 = vset.pattern.permute.xlu0 0
  %80 = vperm.xlu0 %79, %v62
  %v81 = vpop.permute.xlu0 %80
  %v91 = vunpack.c.l.b16 %v15
  %v92 = vunpack.c.h.b16 %v15
  %v93 = vunpack.c.l.b16 %v16
  %v94 = vunpack.c.l.b16 %v17
  %v95 = vunpack.c.h.b16 %v17
  %v96 = vunpack.c.l.b16 %v18
  %v97 = vunpack.c.l.b16 %v19
  %v98 = vunpack.c.h.b16 %v19
  %v99 = vunpack.c.l.b16 %v20
  %v100 = vunpack.c.l.b16 %v21
  %v101 = vunpack.c.h.b16 %v21
  %v102 = vunpack.c.l.b16 %v22
  %v103 = vpack.c.b16 %v94, %v91
  %v104 = vpack.c.b16 %v95, %v92
  %v105 = vpack.c.b16 %v96, %v93
  %v106 = vpack.c.b16 %v100, %v97
  %v107 = vpack.c.b16 %v101, %v98
  %v108 = vpack.c.b16 %v102, %v99
  %v149 = vunpack.c.l.b16 %v23
  %v150 = vunpack.c.l.b16 %v24
  %v151 = vunpack.c.l.b16 %v25
  %v152 = vunpack.c.l.b16 %v26
  %v153 = vunpack.c.l.b16 %v27
  %v154 = vunpack.c.l.b16 %v28
  %v155 = vunpack.c.l.b16 %v29
  %v156 = vunpack.c.l.b16 %v30
  %v157 = vunpack.c.l.b16 %v31
  %v158 = vunpack.c.l.b16 %v32
  %v159 = vunpack.c.l.b16 %v33
  %v160 = vunpack.c.l.b16 %v34
  %v161 = vunpack.c.l.b16 %v35
  %v162 = vunpack.c.l.b16 %v36
  %v163 = vunpack.c.l.b16 %v37
  %v164 = vunpack.c.l.b16 %v38
  %v165 = vunpack.c.l.b16 %v39
  %v166 = vunpack.c.l.b16 %v40
  %v167 = vunpack.c.l.b16 %v41
  %v168 = vunpack.c.l.b16 %v42
  %v169 = vunpack.c.l.b16 %v43
  %v170 = vunpack.c.l.b16 %v44
  %v171 = vunpack.c.l.b16 %v45
  %v172 = vunpack.c.l.b16 %v46
  %v173 = vunpack.c.l.b16 %v47
  %v174 = vunpack.c.l.b16 %v48
  %v175 = vunpack.c.l.b16 %v49
  %v176 = vunpack.c.l.b16 %v50
  %v177 = vunpack.c.l.b16 %v51
  %v178 = vunpack.c.l.b16 %v52
  %v179 = vunpack.c.l.b16 %v53
  %v180 = vunpack.c.l.b16 %v54
  %v181 = vunpack.c.l.b16 %v55
  %v182 = vunpack.c.l.b16 %v56
  %v183 = vunpack.c.l.b16 %v57
  %v184 = vunpack.c.l.b16 %v58
  %v185 = vpack.c.b16 %v150, %v149
  %v186 = vpack.c.b16 %v152, %v151
  %v187 = vpack.c.b16 %v154, %v153
  %v188 = vpack.c.b16 %v156, %v155
  %v189 = vpack.c.b16 %v158, %v157
  %v190 = vpack.c.b16 %v160, %v159
  %v191 = vpack.c.b16 %v162, %v161
  %v192 = vpack.c.b16 %v164, %v163
  %v193 = vpack.c.b16 %v166, %v165
  %v194 = vpack.c.b16 %v168, %v167
  %v195 = vpack.c.b16 %v170, %v169
  %v196 = vpack.c.b16 %v172, %v171
  %v197 = vpack.c.b16 %v174, %v173
  %v198 = vpack.c.b16 %v176, %v175
  %v199 = vpack.c.b16 %v178, %v177
  %v200 = vpack.c.b16 %v180, %v179
  %v201 = vpack.c.b16 %v182, %v181
  %v202 = vpack.c.b16 %v184, %v183
  %vm221 = vcmask 261120
  %v223 = vsel %vm221, %v105, 0
  %v226 = vsel %vm221, %v108, 0
  %228 = vmatprep.subr.bf16.mxu0 0
  %229 = vmatpush1.bf16.msra.mxu0 %v185
  %230 = vmatprep.subr.bf16.mxu0 0
  %231 = vmatpush1.bf16.msra.mxu0 %v186
  %232 = vmatprep.subr.bf16.mxu0 0
  %233 = vmatpush1.bf16.msra.mxu0 %v187
  %234 = vmatprep.subr.bf16.mxu0 0
  %235 = vmatpush1.bf16.msra.mxu0 %v188
  %236 = vmatprep.subr.bf16.mxu0 0
  %237 = vmatpush1.bf16.msra.mxu0 %v189
  %238 = vmatprep.subr.bf16.mxu0 0
  %239 = vmatpush1.bf16.msra.mxu0 %v190
  %240 = vmatprep.subr.bf16.mxu0 0
  %241 = vmatpush1.bf16.msra.mxu0 %v191
  %242 = vmatprep.subr.bf16.mxu0 0
  %243 = vmatpush1.bf16.msra.mxu0 %v192
  %244 = vmatprep.subr.bf16.mxu0 0
  %245 = vmatpush1.bf16.msra.mxu0 %v193
  %246 = vmatprep.subr.bf16.mxu0 0
  %247 = vmatpush1.bf16.msra.mxu0 %v194
  %248 = vmatprep.subr.bf16.mxu0 0
  %249 = vmatpush1.bf16.msra.mxu0 %v195
  %250 = vmatprep.subr.bf16.mxu0 0
  %251 = vmatpush1.bf16.msra.mxu0 %v196
  %252 = vmatprep.subr.bf16.mxu0 0
  %253 = vmatpush1.bf16.msra.mxu0 %v197
  %254 = vmatprep.subr.bf16.mxu0 0
  %255 = vmatpush1.bf16.msra.mxu0 %v198
  %256 = vmatprep.subr.bf16.mxu0 0
  %257 = vmatpush1.bf16.msra.mxu0 %v199
  %258 = vmatprep.subr.bf16.mxu0 0
  %259 = vmatpush1.bf16.msra.mxu0 %v200
  %260 = vmatprep.mubr.bf16.mxu0 %v104
  %261 = vmatmul.mubr.bf16.gmra.mrb[0].mxu0 %v103
  %v262 = vpop.f32.mrb[0].mxu0
  %v263 = vadd.f32 %v66, %v262
  %v264 = vpop.f32.mrb[0].mxu0
  %v265 = vpop.f32.mrb[0].mxu0
  %v266 = vadd.f32 %v71, %v265
  %v267 = vpop.f32.mrb[0].mxu0
  %268 = vmatprep.mubr.bf16.mxu0 %v107
  %269 = vmatmul.mubr.bf16.gmra.mrb[0].mxu0 %v106
  %v270 = vpop.f32.mrb[0].mxu0
  %v271 = vadd.f32 %v76, %v270
  %v272 = vpop.f32.mrb[0].mxu0
  %v273 = vpop.f32.mrb[0].mxu0
  %v274 = vadd.f32 %v81, %v273
  %v275 = vpop.f32.mrb[0].mxu0
  %276 = vdwg.mxu0
  %277 = vmatprep.subr.bf16.mxu0 0
  %278 = vmatpush1.bf16.msra.mxu0 %v201
  %279 = vmatprep.subr.bf16.mxu0 0
  %280 = vmatpush1.bf16.msra.mxu0 %v202
  %281 = vmatprep.subr.bf16.mxu0 0
  %282 = vmatpush1.bf16.msra.mxu0 0
  %283 = vmatprep.subr.bf16.mxu0 0
  %284 = vmatpush1.bf16.msra.mxu0 0
  %285 = vmatprep.subr.bf16.mxu0 0
  %286 = vmatpush1.bf16.msra.mxu0 0
  %287 = vmatprep.subr.bf16.mxu0 0
  %288 = vmatpush1.bf16.msra.mxu0 0
  %289 = vmatprep.subr.bf16.mxu0 0
  %290 = vmatpush1.bf16.msra.mxu0 0
  %291 = vmatprep.subr.bf16.mxu0 0
  %292 = vmatpush1.bf16.msra.mxu0 0
  %293 = vmatprep.subr.bf16.mxu0 0
  %294 = vmatpush1.bf16.msra.mxu0 0
  %295 = vmatprep.subr.bf16.mxu0 0
  %296 = vmatpush1.bf16.msra.mxu0 0
  %297 = vmatprep.subr.bf16.mxu0 0
  %298 = vmatpush1.bf16.msra.mxu0 0
  %299 = vmatprep.subr.bf16.mxu0 0
  %300 = vmatpush1.bf16.msra.mxu0 0
  %301 = vmatprep.subr.bf16.mxu0 0
  %302 = vmatpush1.bf16.msra.mxu0 0
  %303 = vmatprep.subr.bf16.mxu0 0
  %304 = vmatpush1.bf16.msra.mxu0 0
  %305 = vmatprep.subr.bf16.mxu0 0
  %306 = vmatpush1.bf16.msra.mxu0 0
  %307 = vmatprep.subr.bf16.mxu0 0
  %308 = vmatpush1.bf16.msra.mxu0 0
  %309 = vmatprep.mubr.bf16.mxu0 0
  %310 = vmatmul.mubr.bf16.gmra.mrb[0].mxu0 %v223
  %v311 = vpop.f32.mrb[0].mxu0
  %v312 = vadd.f32 %v263, %v311
  %v313 = vpop.f32.mrb[0].mxu0
  %v314 = vpop.f32.mrb[0].mxu0
  %v315 = vadd.f32 %v266, %v314
  %v316 = vpop.f32.mrb[0].mxu0
  %317 = vmatprep.mubr.bf16.mxu0 0
  %318 = vmatmul.mubr.bf16.gmra.mrb[0].mxu0 %v226
  %v319 = vpop.f32.mrb[0].mxu0
  %v320 = vadd.f32 %v271, %v319
  %v321 = vpop.f32.mrb[0].mxu0
  %v322 = vpop.f32.mrb[0].mxu0
  %v323 = vadd.f32 %v274, %v322
  %v324 = vpop.f32.mrb[0].mxu0
  %325 = vdwg.mxu0
  %v326 = vpack.c.bf16 %v315, %v312
  %v327 = vpack.c.bf16 %v323, %v320
  %v330 = vunpack.c.l.b16 %v326
  %v331 = vunpack.c.h.b16 %v326
  %v332 = vunpack.c.l.b16 %v327
  %v333 = vunpack.c.h.b16 %v327
  %v334 = vpack.c.b16 %v330, %v330
  %v335 = vpack.c.b16 %v331, %v331
  %v336 = vpack.c.b16 %v332, %v332
  %v337 = vpack.c.b16 %v333, %v333
  %vm342 = vcmask 519168
  %343 = vst.msk [vmem:[%s3] sm:$0xf] %vm342, %v334
  %344 = vst.msk [vmem:[%s3 + $0x4] sm:$0xf] %vm342, %v335
  %345 = vst.msk [vmem:[%s3 + $0x8] sm:$0xf] %vm342, %v336
  %346 = vst.msk [vmem:[%s3 + $0xc] sm:$0xf] %vm342, %v337
  // Predicated region
  $region14: #{gmm_forward.4} parent=0 // pred_check
    _
  $region15: #{gmm_forward.4} parent=0 // pred_check_branch
    %348 = sbr.rel (0) target = $region17
  $region16: #{gmm_forward.4} parent=0 // pred_region
    _
  $region17: #{gmm_forward.4} parent=0 // pred_fallthru
    _
  // Predicated region
  $region18: #{gmm_forward.4} parent=0 // pred_check
    _
  $region19: #{gmm_forward.4} parent=0 // pred_check_branch
    %350 = sbr.rel (0) target = $region21
  $region20: #{gmm_forward.4} parent=0 // pred_region
    _
  $region21: #{gmm_forward.4} parent=0 // pred_fallthru
    _

// kernel: gmm_forward.5
$region0: #{gmm_forward.5}
  #allocation0 [shape = 'u32[]', space=smem, size = 0x4, offset = 0x4, fixed_abs, tag = 'smem constant byte address 0x4 - core index']
  #allocation1 [shape = 'u32[144,128]{1,0:T(1,128)}', space=vmem, size = 0x12000, scoped, tag = 'internal scratch']
  %s0 = inlined_call_operand.vmem [shape: bf16[16,128], index: 0, kind: input, shape index: {}]
  %s1 = inlined_call_operand.vmem [shape: bf16[16,128], index: 1, kind: input, shape index: {}]
  %s2 = inlined_call_operand.vmem [shape: bf16[16,16], index: 2, kind: input, shape index: {}]
  %s3 = inlined_call_operand.vmem [shape: bf16[16,16], index: 3, kind: input, shape index: {}]
  %s4 = inlined_call_operand.vmem [shape: f32[16,1], index: 4, kind: input, shape index: {}]
  %s5 = inlined_call_operand.vmem [shape: f32[16,1], index: 5, kind: input, shape index: {}]
  %s6 = inlined_call_operand.vmem [shape: f32[16,64], index: 6, kind: input, shape index: {}]
  %s7 = inlined_call_operand.vmem [shape: bf16[16,128], index: 7, kind: output, shape index: {}]
  %s8 = sld [smem:[#allocation0]]
  $region38: #{gmm_forward.5} parent=0
    _
  %s10 = ssub.s32 1, %s8
  %s11 = scalar_select 0, %s10, %s8
  // Predicated region
  $region2: #{gmm_forward.5} parent=0 // pred_check
    _
  $region3: #{gmm_forward.5} parent=0 // pred_check_branch
    %13 = sbr.rel (0) target = $region5
  $region4: #{gmm_forward.5} parent=0 // pred_region
    _
  $region5: #{gmm_forward.5} parent=0 // pred_fallthru
    _
  // Predicated region
  $region6: #{gmm_forward.5} parent=0 // pred_check
    _
  $region7: #{gmm_forward.5} parent=0 // pred_check_branch
    %15 = sbr.rel (0) target = $region9
  $region8: #{gmm_forward.5} parent=0 // pred_region
    _
  $region9: #{gmm_forward.5} parent=0 // pred_fallthru
    _
  // Predicated region
  $region10: #{gmm_forward.5} parent=0 // pred_check
    _
  $region11: #{gmm_forward.5} parent=0 // pred_check_branch
    %17 = sbr.rel (0) target = $region13
  $region12: #{gmm_forward.5} parent=0 // pred_region
    _
  $region13: #{gmm_forward.5} parent=0 // pred_fallthru
    _
  // Predicated region
  $region14: #{gmm_forward.5} parent=0 // pred_check
    _
  $region15: #{gmm_forward.5} parent=0 // pred_check_branch
    %19 = sbr.rel (0) target = $region17
  $region16: #{gmm_forward.5} parent=0 // pred_region
    _
  $region17: #{gmm_forward.5} parent=0 // pred_fallthru
    _
  // Predicated region
  $region18: #{gmm_forward.5} parent=0 // pred_check
    _
  $region19: #{gmm_forward.5} parent=0 // pred_check_branch
    %21 = sbr.rel (0) target = $region21
  $region20: #{gmm_forward.5} parent=0 // pred_region
    _
  $region21: #{gmm_forward.5} parent=0 // pred_fallthru
    _
  // Predicated region
  $region22: #{gmm_forward.5} parent=0 // pred_check
    _
  $region23: #{gmm_forward.5} parent=0 // pred_check_branch
    %23 = sbr.rel (0) target = $region25
  $region24: #{gmm_forward.5} parent=0 // pred_region
    _
  $region25: #{gmm_forward.5} parent=0 // pred_fallthru
    _
  // Predicated region
  $region26: #{gmm_forward.5} parent=0 // pred_check
    _
  $region27: #{gmm_forward.5} parent=0 // pred_check_branch
    %25 = sbr.rel (0) target = $region29
  $region28: #{gmm_forward.5} parent=0 // pred_region
    _
  $region29: #{gmm_forward.5} parent=0 // pred_fallthru
    _
  %v27 = vld [vmem:[%s2] sm:$0xf]
  %v28 = vld [vmem:[%s2 + $0x4] sm:$0xf]
  %v29 = vld [vmem:[%s0] sm:$0xf]
  %v30 = vld [vmem:[%s0 + $0x4] sm:$0xf]
  %v31 = vld [vmem:[%s3] sm:$0xf]
  %v32 = vld [vmem:[%s3 + $0x4] sm:$0xf]
  %v33 = vld [vmem:[%s1] sm:$0xf]
  %v34 = vld [vmem:[%s1 + $0x4] sm:$0xf]
  %v37 = vunpack.c.l.b16 %v31
  %v38 = vunpack.c.l.b16 %v32
  %v39 = vpack.c.b16 %v38, %v37
  %v42 = vunpack.c.l.b16 %v33
  %v43 = vunpack.c.l.b16 %v34
  %v44 = vpack.c.b16 %v43, %v42
  %vm46 = vcmask 130048
  %v48 = vsel %vm46, %v39, 0
  %50 = vmatprep.subr.bf16.mxu0 0
  %51 = vmatpush1.bf16.msra.mxu0 %v44
  %52 = vmatprep.subr.bf16.mxu0 0
  %53 = vmatpush1.bf16.msra.mxu0 0
  %54 = vmatprep.subr.bf16.mxu0 0
  %55 = vmatpush1.bf16.msra.mxu0 0
  %56 = vmatprep.subr.bf16.mxu0 0
  %57 = vmatpush1.bf16.msra.mxu0 0
  %58 = vmatprep.subr.bf16.mxu0 0
  %59 = vmatpush1.bf16.msra.mxu0 0
  %60 = vmatprep.subr.bf16.mxu0 0
  %61 = vmatpush1.bf16.msra.mxu0 0
  %62 = vmatprep.subr.bf16.mxu0 0
  %63 = vmatpush1.bf16.msra.mxu0 0
  %64 = vmatprep.subr.bf16.mxu0 0
  %65 = vmatpush1.bf16.msra.mxu0 0
  %66 = vmatprep.subr.bf16.mxu0 0
  %67 = vmatpush1.bf16.msra.mxu0 0
  %68 = vmatprep.subr.bf16.mxu0 0
  %69 = vmatpush1.bf16.msra.mxu0 0
  %70 = vmatprep.subr.bf16.mxu0 0
  %71 = vmatpush1.bf16.msra.mxu0 0
  %72 = vmatprep.subr.bf16.mxu0 0
  %73 = vmatpush1.bf16.msra.mxu0 0
  %74 = vmatprep.subr.bf16.mxu0 0
  %75 = vmatpush1.bf16.msra.mxu0 0
  %76 = vmatprep.subr.bf16.mxu0 0
  %77 = vmatpush1.bf16.msra.mxu0 0
  %78 = vmatprep.subr.bf16.mxu0 0
  %79 = vmatpush1.bf16.msra.mxu0 0
  %80 = vmatprep.subr.bf16.mxu0 0
  %81 = vmatpush1.bf16.msra.mxu0 0
  %82 = vmatprep.mubr.bf16.mxu0 0
  %83 = vmatmul.mubr.bf16.gmra.mrb[0].mxu0 %v48
  %v84 = vpop.f32.mrb[0].mxu0
  %v85 = vadd.f32 0.0, %v84
  %v86 = vpop.f32.mrb[0].mxu0
  %v87 = vpop.f32.mrb[0].mxu0
  %v88 = vadd.f32 0.0, %v87
  %v89 = vpop.f32.mrb[0].mxu0
  %90 = vdwg.mxu0
  %v93 = vunpack.c.l.b16 %v27
  %v94 = vunpack.c.l.b16 %v28
  %v95 = vpack.c.b16 %v94, %v93
  %v98 = vunpack.c.l.b16 %v29
  %v99 = vunpack.c.l.b16 %v30
  %v100 = vpack.c.b16 %v99, %v98
  %v103 = vsel %vm46, %v95, 0
  %105 = vmatprep.subr.bf16.mxu0 0
  %106 = vmatpush1.bf16.msra.mxu0 %v100
  %107 = vmatprep.subr.bf16.mxu0 0
  %108 = vmatpush1.bf16.msra.mxu0 0
  %109 = vmatprep.subr.bf16.mxu0 0
  %110 = vmatpush1.bf16.msra.mxu0 0
  %111 = vmatprep.subr.bf16.mxu0 0
  %112 = vmatpush1.bf16.msra.mxu0 0
  %113 = vmatprep.subr.bf16.mxu0 0
  %114 = vmatpush1.bf16.msra.mxu0 0
  %115 = vmatprep.subr.bf16.mxu0 0
  %116 = vmatpush1.bf16.msra.mxu0 0
  %117 = vmatprep.subr.bf16.mxu0 0
  %118 = vmatpush1.bf16.msra.mxu0 0
  %119 = vmatprep.subr.bf16.mxu0 0
  %120 = vmatpush1.bf16.msra.mxu0 0
  %121 = vmatprep.subr.bf16.mxu0 0
  %122 = vmatpush1.bf16.msra.mxu0 0
  %123 = vmatprep.subr.bf16.mxu0 0
  %124 = vmatpush1.bf16.msra.mxu0 0
  %125 = vmatprep.subr.bf16.mxu0 0
  %126 = vmatpush1.bf16.msra.mxu0 0
  %127 = vmatprep.subr.bf16.mxu0 0
  %128 = vmatpush1.bf16.msra.mxu0 0
  %129 = vmatprep.subr.bf16.mxu0 0
  %130 = vmatpush1.bf16.msra.mxu0 0
  %131 = vmatprep.subr.bf16.mxu0 0
  %132 = vmatpush1.bf16.msra.mxu0 0
  %133 = vmatprep.subr.bf16.mxu0 0
  %134 = vmatpush1.bf16.msra.mxu0 0
  %135 = vmatprep.subr.bf16.mxu0 0
  %136 = vmatpush1.bf16.msra.mxu0 0
  %137 = vmatprep.mubr.bf16.mxu0 0
  %138 = vmatmul.mubr.bf16.gmra.mrb[0].mxu0 %v103
  %v139 = vpop.f32.mrb[0].mxu0
  %v140 = vadd.f32 %v85, %v139
  %v141 = vpop.f32.mrb[0].mxu0
  %v142 = vpop.f32.mrb[0].mxu0
  %v143 = vadd.f32 %v88, %v142
  %v144 = vpop.f32.mrb[0].mxu0
  %145 = vdwg.mxu0
  %146 = vadd.xlane.f32.xlu0 %v140
  %v147 = vpop.xlane.xlu0 %146
  %148 = vadd.xlane.f32.xlu0 %v143
  %v149 = vpop.xlane.xlu0 %148
  %v150 = vrcp.pop 128.0
  %v151 = vmul.f32 %v147, %v150
  %v152 = vmul.f32 %v149, %v150
  %v153 = vsub.f32 %v140, %v151
  %v154 = vsub.f32 %v143, %v152
  %v155 = vmul.f32 %v153, %v153
  %v156 = vmul.f32 %v154, %v154
  %157 = vadd.xlane.f32.xlu0 %v155
  %v158 = vpop.xlane.xlu0 %157
  %159 = vadd.xlane.f32.xlu0 %v156
  %v160 = vpop.xlane.xlu0 %159
  %v161 = vmul.f32 %v158, %v150
  %v162 = vmul.f32 %v160, %v150
  %v163 = vadd.f32 %v161, 1e-05
  %v164 = vadd.f32 %v162, 1e-05
  %v165 = vrsqrt.pop %v163
  %v166 = vrsqrt.pop %v164
  %v167 = vmul.f32 %v153, %v165
  %v168 = vmul.f32 %v154, %v166
  %v169 = vld [vmem:[%s4] sm:$0xff]
  %v170 = vld [vmem:[%s4 + $0x8] sm:$0xff]
  %172 = vset.pattern.permute.xlu0 0
  %173 = vperm.xlu0 %172, %v169
  %v174 = vpop.permute.xlu0 %173
  %177 = vset.pattern.permute.xlu0 0
  %178 = vperm.xlu0 %177, %v170
  %v179 = vpop.permute.xlu0 %178
  %v181 = vmul.f32 %v167, %v174
  %v182 = vmul.f32 %v168, %v179
  %v183 = vld [vmem:[%s5] sm:$0xff]
  %v184 = vld [vmem:[%s5 + $0x8] sm:$0xff]
  %186 = vset.pattern.permute.xlu0 0
  %187 = vperm.xlu0 %186, %v183
  %v188 = vpop.permute.xlu0 %187
  %191 = vset.pattern.permute.xlu0 0
  %192 = vperm.xlu0 %191, %v184
  %v193 = vpop.permute.xlu0 %192
  %v195 = vadd.f32 %v181, %v188
  %v196 = vadd.f32 %v182, %v193
  %v197 = vmul.f32 %v195, 0.5
  %v198 = vmul.f32 %v196, 0.5
  %v199 = vmul.f32 %v195, 0.70710677
  %v200 = vmul.f32 %v196, 0.70710677
  %v201 = verf.f32.pop %v199
  %v202 = verf.f32.pop %v200
  %v203 = vadd.f32 %v201, 1.0
  %v204 = vadd.f32 %v202, 1.0
  %v205 = vmul.f32 %v197, %v203
  %v206 = vmul.f32 %v198, %v204
  %v207 = vld [vmem:[%s6] sm:$0xff]
  %v208 = vld [vmem:[%s6 + $0x8] sm:$0xff]
  %211 = vrot.lane.b32.xlu0 %v207, 64
  %v212 = vpop.permute.xlu0 %211
  %213 = vrot.lane.b32.xlu0 %v208, 64
  %v214 = vpop.permute.xlu0 %213
  %vm217 = vcmask 523264
  %v218 = vsel %vm217, %v207, %v212
  %v219 = vsel %vm217, %v208, %v214
  %v220 = vadd.f32 %v205, %v218
  %v221 = vadd.f32 %v206, %v219
  %v222 = vpack.c.bf16 %v221, %v220
  %v224 = vunpack.c.l.b16 %v222
  %v225 = vunpack.c.h.b16 %v222
  %v226 = vpack.c.b16 %v224, %v224
  %v227 = vpack.c.b16 %v225, %v225
  %230 = vst [vmem:[%s7] sm:$0xf] %v226
  %231 = vst [vmem:[%s7 + $0x4] sm:$0xf] %v227
  // Predicated region
  $region30: #{gmm_forward.5} parent=0 // pred_check
    _
  $region31: #{gmm_forward.5} parent=0 // pred_check_branch
    %233 = sbr.rel (0) target = $region33
  $region32: #{gmm_forward.5} parent=0 // pred_region
    _
  $region33: #{gmm_forward.5} parent=0 // pred_fallthru
    _
  // Predicated region
  $region34: #{gmm_forward.5} parent=0 // pred_check
    _
  $region35: #{gmm_forward.5} parent=0 // pred_check_branch
    %235 = sbr.rel (0) target = $region37
  $region36: #{gmm_forward.5} parent=0 // pred_region
    _
  $region37: #{gmm_forward.5} parent=0 // pred_fallthru
    _

// kernel: gmm_forward.7
$region0: #{gmm_forward.7}
  #allocation0 [shape = 'u32[]', space=smem, size = 0x4, offset = 0x4, fixed_abs, tag = 'smem constant byte address 0x4 - core index']
  #allocation1 [shape = 'u32[144,128]{1,0:T(1,128)}', space=vmem, size = 0x12000, scoped, tag = 'internal scratch']
  %s0 = inlined_call_operand.vmem [shape: bf16[16,128], index: 0, kind: input, shape index: {}]
  %s1 = inlined_call_operand.vmem [shape: bf16[16,128], index: 1, kind: input, shape index: {}]
  %s2 = inlined_call_operand.vmem [shape: bf16[16,16], index: 2, kind: input, shape index: {}]
  %s3 = inlined_call_operand.vmem [shape: bf16[16,16], index: 3, kind: input, shape index: {}]
  %s4 = inlined_call_operand.vmem [shape: f32[16,128], index: 4, kind: output, shape index: {}]
  %s5 = sld [smem:[#allocation0]]
  $region26: #{gmm_forward.7} parent=0
    _
  %s7 = ssub.s32 1, %s5
  %s8 = scalar_select 0, %s7, %s5
  // Predicated region
  $region2: #{gmm_forward.7} parent=0 // pred_check
    _
  $region3: #{gmm_forward.7} parent=0 // pred_check_branch
    %10 = sbr.rel (0) target = $region5
  $region4: #{gmm_forward.7} parent=0 // pred_region
    _
  $region5: #{gmm_forward.7} parent=0 // pred_fallthru
    _
  // Predicated region
  $region6: #{gmm_forward.7} parent=0 // pred_check
    _
  $region7: #{gmm_forward.7} parent=0 // pred_check_branch
    %12 = sbr.rel (0) target = $region9
  $region8: #{gmm_forward.7} parent=0 // pred_region
    _
  $region9: #{gmm_forward.7} parent=0 // pred_fallthru
    _
  // Predicated region
  $region10: #{gmm_forward.7} parent=0 // pred_check
    _
  $region11: #{gmm_forward.7} parent=0 // pred_check_branch
    %14 = sbr.rel (0) target = $region13
  $region12: #{gmm_forward.7} parent=0 // pred_region
    _
  $region13: #{gmm_forward.7} parent=0 // pred_fallthru
    _
  // Predicated region
  $region14: #{gmm_forward.7} parent=0 // pred_check
    _
  $region15: #{gmm_forward.7} parent=0 // pred_check_branch
    %16 = sbr.rel (0) target = $region17
  $region16: #{gmm_forward.7} parent=0 // pred_region
    _
  $region17: #{gmm_forward.7} parent=0 // pred_fallthru
    _
  %v18 = vld [vmem:[%s2] sm:$0xf]
  %v19 = vld [vmem:[%s2 + $0x4] sm:$0xf]
  %v20 = vld [vmem:[%s0] sm:$0xf]
  %v21 = vld [vmem:[%s0 + $0x4] sm:$0xf]
  %v22 = vld [vmem:[%s3] sm:$0xf]
  %v23 = vld [vmem:[%s3 + $0x4] sm:$0xf]
  %v24 = vld [vmem:[%s1] sm:$0xf]
  %v25 = vld [vmem:[%s1 + $0x4] sm:$0xf]
  %v28 = vunpack.c.l.b16 %v22
  %v29 = vunpack.c.l.b16 %v23
  %v30 = vpack.c.b16 %v29, %v28
  %v33 = vunpack.c.l.b16 %v24
  %v34 = vunpack.c.l.b16 %v25
  %v35 = vpack.c.b16 %v34, %v33
  %vm37 = vcmask 130048
  %v39 = vsel %vm37, %v30, 0
  %41 = vmatprep.subr.bf16.mxu0 0
  %42 = vmatpush1.bf16.msra.mxu0 %v35
  %43 = vmatprep.subr.bf16.mxu0 0
  %44 = vmatpush1.bf16.msra.mxu0 0
  %45 = vmatprep.subr.bf16.mxu0 0
  %46 = vmatpush1.bf16.msra.mxu0 0
  %47 = vmatprep.subr.bf16.mxu0 0
  %48 = vmatpush1.bf16.msra.mxu0 0
  %49 = vmatprep.subr.bf16.mxu0 0
  %50 = vmatpush1.bf16.msra.mxu0 0
  %51 = vmatprep.subr.bf16.mxu0 0
  %52 = vmatpush1.bf16.msra.mxu0 0
  %53 = vmatprep.subr.bf16.mxu0 0
  %54 = vmatpush1.bf16.msra.mxu0 0
  %55 = vmatprep.subr.bf16.mxu0 0
  %56 = vmatpush1.bf16.msra.mxu0 0
  %57 = vmatprep.subr.bf16.mxu0 0
  %58 = vmatpush1.bf16.msra.mxu0 0
  %59 = vmatprep.subr.bf16.mxu0 0
  %60 = vmatpush1.bf16.msra.mxu0 0
  %61 = vmatprep.subr.bf16.mxu0 0
  %62 = vmatpush1.bf16.msra.mxu0 0
  %63 = vmatprep.subr.bf16.mxu0 0
  %64 = vmatpush1.bf16.msra.mxu0 0
  %65 = vmatprep.subr.bf16.mxu0 0
  %66 = vmatpush1.bf16.msra.mxu0 0
  %67 = vmatprep.subr.bf16.mxu0 0
  %68 = vmatpush1.bf16.msra.mxu0 0
  %69 = vmatprep.subr.bf16.mxu0 0
  %70 = vmatpush1.bf16.msra.mxu0 0
  %71 = vmatprep.subr.bf16.mxu0 0
  %72 = vmatpush1.bf16.msra.mxu0 0
  %73 = vmatprep.mubr.bf16.mxu0 0
  %74 = vmatmul.mubr.bf16.gmra.mrb[0].mxu0 %v39
  %v75 = vpop.f32.mrb[0].mxu0
  %v76 = vadd.f32 0.0, %v75
  %v77 = vpop.f32.mrb[0].mxu0
  %v78 = vpop.f32.mrb[0].mxu0
  %v79 = vadd.f32 0.0, %v78
  %v80 = vpop.f32.mrb[0].mxu0
  %81 = vdwg.mxu0
  %v84 = vunpack.c.l.b16 %v18
  %v85 = vunpack.c.l.b16 %v19
  %v86 = vpack.c.b16 %v85, %v84
  %v89 = vunpack.c.l.b16 %v20
  %v90 = vunpack.c.l.b16 %v21
  %v91 = vpack.c.b16 %v90, %v89
  %v94 = vsel %vm37, %v86, 0
  %96 = vmatprep.subr.bf16.mxu0 0
  %97 = vmatpush1.bf16.msra.mxu0 %v91
  %98 = vmatprep.subr.bf16.mxu0 0
  %99 = vmatpush1.bf16.msra.mxu0 0
  %100 = vmatprep.subr.bf16.mxu0 0
  %101 = vmatpush1.bf16.msra.mxu0 0
  %102 = vmatprep.subr.bf16.mxu0 0
  %103 = vmatpush1.bf16.msra.mxu0 0
  %104 = vmatprep.subr.bf16.mxu0 0
  %105 = vmatpush1.bf16.msra.mxu0 0
  %106 = vmatprep.subr.bf16.mxu0 0
  %107 = vmatpush1.bf16.msra.mxu0 0
  %108 = vmatprep.subr.bf16.mxu0 0
  %109 = vmatpush1.bf16.msra.mxu0 0
  %110 = vmatprep.subr.bf16.mxu0 0
  %111 = vmatpush1.bf16.msra.mxu0 0
  %112 = vmatprep.subr.bf16.mxu0 0
  %113 = vmatpush1.bf16.msra.mxu0 0
  %114 = vmatprep.subr.bf16.mxu0 0
  %115 = vmatpush1.bf16.msra.mxu0 0
  %116 = vmatprep.subr.bf16.mxu0 0
  %117 = vmatpush1.bf16.msra.mxu0 0
  %118 = vmatprep.subr.bf16.mxu0 0
  %119 = vmatpush1.bf16.msra.mxu0 0
  %120 = vmatprep.subr.bf16.mxu0 0
  %121 = vmatpush1.bf16.msra.mxu0 0
  %122 = vmatprep.subr.bf16.mxu0 0
  %123 = vmatpush1.bf16.msra.mxu0 0
  %124 = vmatprep.subr.bf16.mxu0 0
  %125 = vmatpush1.bf16.msra.mxu0 0
  %126 = vmatprep.subr.bf16.mxu0 0
  %127 = vmatpush1.bf16.msra.mxu0 0
  %128 = vmatprep.mubr.bf16.mxu0 0
  %129 = vmatmul.mubr.bf16.gmra.mrb[0].mxu0 %v94
  %v130 = vpop.f32.mrb[0].mxu0
  %v131 = vadd.f32 %v76, %v130
  %v132 = vpop.f32.mrb[0].mxu0
  %v133 = vpop.f32.mrb[0].mxu0
  %v134 = vadd.f32 %v79, %v133
  %v135 = vpop.f32.mrb[0].mxu0
  %136 = vdwg.mxu0
  %137 = vst [vmem:[%s4] sm:$0xff] %v131
  %138 = vst [vmem:[%s4 + $0x8] sm:$0xff] %v134
  // Predicated region
  $region18: #{gmm_forward.7} parent=0 // pred_check
    _
  $region19: #{gmm_forward.7} parent=0 // pred_check_branch
    %140 = sbr.rel (0) target = $region21
  $region20: #{gmm_forward.7} parent=0 // pred_region
    _
  $region21: #{gmm_forward.7} parent=0 // pred_fallthru
    _
  // Predicated region
  $region22: #{gmm_forward.7} parent=0 // pred_check
    _
  $region23: #{gmm_forward.7} parent=0 // pred_check_branch
    %142 = sbr.rel (0) target = $region25
  $region24: #{gmm_forward.7} parent=0 // pred_region
    _
  $region25: #{gmm_forward.7} parent=0 // pred_fallthru
    _

</llo_original>
